<compile_context>
chip_gen: v6e
topology: v6e:2x2x1
jax: 0.10.0
libtpu: 0.0.40
codegen_flags: <defaults>
</compile_context>

<pallas_src>
import functools

import jax
import jax.numpy as jnp
from jax.experimental import pallas as pl
from jax.experimental.pallas import tpu as pltpu


# ---------------------------------------------------------------------------
# Pallas kernel: ConditionalLayerNormalization (stats + affine only; the
# language projections are precomputed per batch row in the wrapper).
# ---------------------------------------------------------------------------
def cond_layernorm_kernel(x_ref, scale_ref, shift_ref, o_ref, *, eps, features):
    # x_ref:     (tS, F)  activation tile for (batch row b, seq tile s)
    # scale_ref: (1, F)   alpha * (lang @ Ws^T + bs)   for batch row b
    # shift_ref: (1, F)   beta  + (lang @ Wb^T + bb)   for batch row b
    x = x_ref[...].astype(jnp.float32)                        # x.float()
    n = jnp.float32(features)
    s1 = jnp.sum(x, axis=-1, keepdims=True)                   # (tS, 1)
    s2 = jnp.sum(x * x, axis=-1, keepdims=True)                # (tS, 1)
    mean = s1 * (1.0 / n)
    # torch .std() default: UNBIASED estimator (divide by N-1)
    var = jnp.maximum(s2 - n * mean * mean, 0.0) * (1.0 / (n - 1.0))
    inv = pl.reciprocal(jnp.sqrt(var) + eps, approx=True)      # EUP, not VALU
    normed = (x - mean) * inv
    o_ref[...] = (scale_ref[...] * normed + shift_ref[...]).astype(o_ref.dtype)


# ---------------------------------------------------------------------------
# Tile selection: dtype-aware, never returns a non-sublane-aligned tile, and
# never a divisor-less "whole S" fallback (the wrapper pads S instead).
# ---------------------------------------------------------------------------
def _pick_seq_tile(S, F, itemsize, target_bytes=4 << 20):
    sub = {4: 8, 2: 16, 1: 32}.get(itemsize, 8)      # sublane quantum per dtype
    row_bytes = max(1, F * itemsize)
    max_rows = max(sub, (target_bytes // row_bytes) // sub * sub)
    if S <= max_rows:
        return ((S + sub - 1) // sub) * sub          # one (padded) tile covers S
    return max_rows


# ---------------------------------------------------------------------------
# Wrapper
# ---------------------------------------------------------------------------
def conditional_layer_norm(x, lang_embedding, *, alpha, bias,
                           lang_scale_w, lang_scale_b,
                           lang_bias_w, lang_bias_b, eps=1e-6,
                           out_dtype=jnp.float32):
    """Pallas implementation of ConditionalLayerNormalization.forward.

    x:              (B, S, F)
    lang_embedding: (B, E)
    lang_scale_w / lang_bias_w: (F, E)   torch nn.Linear weight layout
    lang_scale_b / lang_bias_b: (F,)
    alpha / bias:   (F,)

    Note: production shapes should have F a multiple of 128 for lane-dense
    stores; the kernel is correct (masked stores) but slower otherwise.
    """
    B, S, F = x.shape
    assert F > 1, "unbiased std needs features > 1"
    f32 = jnp.float32

    # Hoisted per-batch conditional projections (tiny B x E x F XLA matmuls).
    lang = lang_embedding.astype(f32)
    cond_scale = lang @ lang_scale_w.astype(f32).T + lang_scale_b.astype(f32)
    cond_bias = lang @ lang_bias_w.astype(f32).T + lang_bias_b.astype(f32)
    scale_rows = (alpha.astype(f32)[None, :] * cond_scale).reshape(B, 1, F)
    shift_rows = (bias.astype(f32)[None, :] + cond_bias).reshape(B, 1, F)

    itemsize = jnp.dtype(x.dtype).itemsize
    o_itemsize = jnp.dtype(out_dtype).itemsize
    tS = _pick_seq_tile(S, F, itemsize)
    S_pad = pl.cdiv(S, tS) * tS
    x_in = x if S_pad == S else jnp.pad(x, ((0, 0), (0, S_pad - S), (0, 0)))
    grid = (B, S_pad // tS)   # batch outer: scale/shift rows stay VMEM-resident

    # VMEM budget: 2 x (in tile + out tile) double-buffers + param rows + slack.
    vmem_needed = 2 * tS * F * (itemsize + o_itemsize) + 4 * F * 4 + (1 << 20)
    vmem_limit = int(min(64 << 20, max(32 << 20, 2 * vmem_needed)))

    cost = pl.CostEstimate(
        flops=int(8 * B * S_pad * F),
        transcendentals=int(2 * B * S_pad),
        bytes_accessed=int(B * S_pad * F * (itemsize + o_itemsize) + 2 * B * F * 4),
    )

    kernel = functools.partial(cond_layernorm_kernel, eps=eps, features=F)
    out = pl.pallas_call(
        kernel,
        out_shape=jax.ShapeDtypeStruct((B, S_pad, F), out_dtype),
        grid_spec=pltpu.PrefetchScalarGridSpec(
            num_scalar_prefetch=0,
            grid=grid,
            in_specs=[
                pl.BlockSpec((pl.Squeezed(), tS, F), lambda b, s: (b, s, 0)),  # x
                pl.BlockSpec((pl.Squeezed(), 1, F), lambda b, s: (b, 0, 0)),   # scale
                pl.BlockSpec((pl.Squeezed(), 1, F), lambda b, s: (b, 0, 0)),   # shift
            ],
            out_specs=pl.BlockSpec((pl.Squeezed(), tS, F), lambda b, s: (b, s, 0)),
        ),
        compiler_params=pltpu.CompilerParams(
            # every (b, s) tile is independent -> megacore sharding on v7x
            dimension_semantics=("parallel", "parallel"),
            vmem_limit_bytes=vmem_limit),
        cost_estimate=cost,
    )(x_in, scale_rows, shift_rows)

    return out if S_pad == S else out[:, :S, :]


def decoder_forward(x, encoder_output, src_mask, tgt_mask, lang_embedding,
                    norm_params, layers=()):
    """Mirrors Decoder.forward."""
    # TODO(synk): DecoderBlock layer definitions are not provided in the spec;
    #             they are applied here as plain callables (empty in the demo).
    for layer in layers:
        x = layer(x, encoder_output, src_mask, tgt_mask, lang_embedding)
    return conditional_layer_norm(x, lang_embedding, **norm_params)


# ---------------------------------------------------------------------------
# Demo / self-check
# ---------------------------------------------------------------------------
if __name__ == "__main__":
    B, S, F, E = 2, 8, 32, 16

    key = jax.random.PRNGKey(0)
    kx, kl, k1, k2, k3, k4 = jax.random.split(key, 6)

    x = jax.random.normal(kx, (B, S, F), dtype=jnp.float32)
    lang = jax.random.normal(kl, (B, E), dtype=jnp.float32)
    enc_out = jnp.zeros((B, S, F), jnp.float32)   # unused: no layers provided
    src_mask = tgt_mask = None

    norm_params = dict(
        alpha=jnp.ones((F,), jnp.float32),         # torch.ones(features)
        bias=jnp.zeros((F,), jnp.float32),         # torch.zeros(features)
        lang_scale_w=0.1 * jax.random.normal(k1, (F, E), jnp.float32),
        lang_scale_b=0.1 * jax.random.normal(k2, (F,), jnp.float32),
        lang_bias_w=0.1 * jax.random.normal(k3, (F, E), jnp.float32),
        lang_bias_b=0.1 * jax.random.normal(k4, (F,), jnp.float32),
        eps=1e-6,
    )

    out = decoder_forward(x, enc_out, src_mask, tgt_mask, lang, norm_params)
    out = jax.block_until_ready(out)

    # Plain-JAX reference (mirrors the PyTorch module, incl. unbiased std).
    xm = x.astype(jnp.float32)
    mean = xm.mean(axis=-1, keepdims=True)
    std = jnp.std(xm, axis=-1, keepdims=True, ddof=1)
    normed = (xm - mean) / (std + 1e-6)
    cs = lang @ norm_params["lang_scale_w"].T + norm_params["lang_scale_b"]
    cb = lang @ norm_params["lang_bias_w"].T + norm_params["lang_bias_b"]
    ref = (norm_params["alpha"] * cs[:, None, :] * normed
           + norm_params["bias"] + cb[:, None, :])

    assert out.shape == ref.shape, (out.shape, ref.shape)
    max_err = float(jnp.max(jnp.abs(out - ref)))
    # approx reciprocal (EUP) -> slightly looser tolerance than exact divide
    assert jnp.allclose(out, ref, atol=2e-2, rtol=2e-2), f"max_err={max_err}"

    print("KERNEL_OK")
</pallas_src>

<mosaic_0001>
module attributes {stable_mosaic.version = 11 : i64} {
  func.func @cond_layernorm_kernel(%arg0: i32, %arg1: i32, %arg2: memref<1x8x32xf32, #tpu.memory_space<vmem>>, %arg3: memref<1x1x32xf32, #tpu.memory_space<vmem>>, %arg4: memref<1x1x32xf32, #tpu.memory_space<vmem>>, %arg5: memref<1x8x32xf32, #tpu.memory_space<vmem>>) attributes {dimension_semantics = [#tpu.dimension_semantics<parallel>, #tpu.dimension_semantics<parallel>], iteration_bounds = array<i64: 2, 1>, scalar_prefetch = 0 : i64, scratch_operands = 0 : i64, tpu.core_type = #tpu.core_type<tc>, window_params = [{transform_indices = @transform_0, window_bounds = array<i64: 1, 8, 32>}, {transform_indices = @transform_1, window_bounds = array<i64: 1, 1, 32>}, {transform_indices = @transform_2, window_bounds = array<i64: 1, 1, 32>}, {transform_indices = @transform_3, window_bounds = array<i64: 1, 8, 32>}]} {
    %c0 = arith.constant 0 : index
    %c0_0 = arith.constant 0 : index
    %c0_1 = arith.constant 0 : index
    %0 = vector.load %arg2[%c0, %c0_0, %c0_1] : memref<1x8x32xf32, #tpu.memory_space<vmem>>, vector<1x8x32xf32>
    %1 = vector.shape_cast %0 : vector<1x8x32xf32> to vector<8x32xf32>
    %cst = arith.constant dense<0.000000e+00> : vector<8xf32>
    %2 = vector.multi_reduction <add>, %1, %cst [1] : vector<8x32xf32> to vector<8xf32>
    %3 = vector.shape_cast %2 : vector<8xf32> to vector<8x1xf32>
    %4 = arith.mulf %1, %1 : vector<8x32xf32>
    %cst_2 = arith.constant dense<0.000000e+00> : vector<8xf32>
    %5 = vector.multi_reduction <add>, %4, %cst_2 [1] : vector<8x32xf32> to vector<8xf32>
    %6 = vector.shape_cast %5 : vector<8xf32> to vector<8x1xf32>
    %cst_3 = arith.constant 1.000000e+00 : f32
    %cst_4 = arith.constant 3.200000e+01 : f32
    %7 = arith.divf %cst_3, %cst_4 : f32
    %8 = vector.broadcast %7 : f32 to vector<8x1xf32>
    %9 = arith.mulf %3, %8 : vector<8x1xf32>
    %cst_5 = arith.constant 3.200000e+01 : f32
    %10 = vector.broadcast %cst_5 : f32 to vector<8x1xf32>
    %11 = arith.mulf %10, %9 : vector<8x1xf32>
    %12 = arith.mulf %11, %9 : vector<8x1xf32>
    %13 = arith.subf %6, %12 : vector<8x1xf32>
    %cst_6 = arith.constant 0.000000e+00 : f32
    %14 = vector.broadcast %cst_6 : f32 to vector<8x1xf32>
    %15 = arith.maximumf %13, %14 : vector<8x1xf32>
    %cst_7 = arith.constant 3.200000e+01 : f32
    %cst_8 = arith.constant 1.000000e+00 : f32
    %16 = arith.subf %cst_7, %cst_8 : f32
    %cst_9 = arith.constant 1.000000e+00 : f32
    %17 = arith.divf %cst_9, %16 : f32
    %18 = vector.broadcast %17 : f32 to vector<8x1xf32>
    %19 = arith.mulf %15, %18 : vector<8x1xf32>
    %20 = math.sqrt %19 : vector<8x1xf32>
    %cst_10 = arith.constant 9.99999997E-7 : f32
    %21 = vector.broadcast %cst_10 : f32 to vector<8x1xf32>
    %22 = arith.addf %20, %21 : vector<8x1xf32>
    %23 = tpu.reciprocal %22 {approx = true} : vector<8x1xf32> -> vector<8x1xf32>
    %24 = vector.broadcast %9 : vector<8x1xf32> to vector<8x32xf32>
    %25 = arith.subf %1, %24 : vector<8x32xf32>
    %26 = vector.broadcast %23 : vector<8x1xf32> to vector<8x32xf32>
    %27 = arith.mulf %25, %26 : vector<8x32xf32>
    %c0_11 = arith.constant 0 : index
    %c0_12 = arith.constant 0 : index
    %c0_13 = arith.constant 0 : index
    %28 = vector.load %arg3[%c0_11, %c0_12, %c0_13] : memref<1x1x32xf32, #tpu.memory_space<vmem>>, vector<1x1x32xf32>
    %29 = vector.shape_cast %28 : vector<1x1x32xf32> to vector<1x32xf32>
    %30 = vector.broadcast %29 : vector<1x32xf32> to vector<8x32xf32>
    %31 = arith.mulf %30, %27 : vector<8x32xf32>
    %c0_14 = arith.constant 0 : index
    %c0_15 = arith.constant 0 : index
    %c0_16 = arith.constant 0 : index
    %32 = vector.load %arg4[%c0_14, %c0_15, %c0_16] : memref<1x1x32xf32, #tpu.memory_space<vmem>>, vector<1x1x32xf32>
    %33 = vector.shape_cast %32 : vector<1x1x32xf32> to vector<1x32xf32>
    %34 = vector.broadcast %33 : vector<1x32xf32> to vector<8x32xf32>
    %35 = arith.addf %31, %34 : vector<8x32xf32>
    %c0_17 = arith.constant 0 : index
    %c0_18 = arith.constant 0 : index
    %c0_19 = arith.constant 0 : index
    %36 = vector.load %arg5[%c0_17, %c0_18, %c0_19] : memref<1x8x32xf32, #tpu.memory_space<vmem>>, vector<1x8x32xf32>
    %37 = vector.shape_cast %36 : vector<1x8x32xf32> to vector<8x32xf32>
    %38 = vector.shape_cast %35 : vector<8x32xf32> to vector<1x8x32xf32>
    tpu.vector_store %arg5[%c0_17, %c0_18, %c0_19], %38 {strides = array<i32>} : memref<1x8x32xf32, #tpu.memory_space<vmem>>, vector<1x8x32xf32>,
    return
  }
  func.func @transform_0(%arg0: i32, %arg1: i32) -> (i32, i32, i32) {
    %c0_i32 = arith.constant 0 : i32
    %c0_i32_0 = arith.constant 0 : i32
    return %arg0, %arg1, %c0_i32 : i32, i32, i32
  }
  func.func @transform_1(%arg0: i32, %arg1: i32) -> (i32, i32, i32) {
    %c0_i32 = arith.constant 0 : i32
    %c0_i32_0 = arith.constant 0 : i32
    %c0_i32_1 = arith.constant 0 : i32
    return %arg0, %c0_i32, %c0_i32_0 : i32, i32, i32
  }
  func.func @transform_2(%arg0: i32, %arg1: i32) -> (i32, i32, i32) {
    %c0_i32 = arith.constant 0 : i32
    %c0_i32_0 = arith.constant 0 : i32
    %c0_i32_1 = arith.constant 0 : i32
    return %arg0, %c0_i32, %c0_i32_0 : i32, i32, i32
  }
  func.func @transform_3(%arg0: i32, %arg1: i32) -> (i32, i32, i32) {
    %c0_i32 = arith.constant 0 : i32
    %c0_i32_0 = arith.constant 0 : i32
    return %arg0, %arg1, %c0_i32 : i32, i32, i32
  }
}

</mosaic_0001>

<llo_original>
// kernel: tpu_custom_call.1
$region0: #{tpu_custom_call.1}
  #allocation0 [shape = 'u32[]', space=smem, size = 0x4, offset = 0x4, fixed_abs, tag = 'smem constant byte address 0x4 - core index']
  #allocation1 [shape = 'u32[144,128]{1,0:T(1,128)}', space=vmem, size = 0x12000, scoped, tag = 'internal scratch']
  %s0 = inlined_call_operand.hbm [shape: f32[2,8,32], index: 0, kind: input, shape index: {}]
  %s1 = inlined_call_operand.hbm [shape: f32[2,1,32], index: 1, kind: input, shape index: {}]
  %s2 = inlined_call_operand.vmem [shape: f32[2,1,32], index: 2, kind: input, shape index: {}]
  %s3 = inlined_call_operand.hbm [shape: f32[2,8,32], index: 3, kind: output, shape index: {}]
  %s4 = sld [smem:[#allocation0]]
  $region53: #{tpu_custom_call.1} parent=0
    _
  %s6 = ssub.s32 1, %s4
  %s7 = scalar_select 0, %s6, %s4
  $region1: #{tpu_custom_call.1} parent=0
    #allocation2 [shape = 'u8[8192]{0}', space=vmem, size = 0x2000, scoped, tag = 'input window, operand 0']
    #allocation3 [shape = 's32[2]{0}', space=sflag, size = 0x8, scoped, tag = 'scoped memory for tpu_custom_call.1']
    #allocation4 [shape = 's32[2]{0}', space=sflag, size = 0x8, scoped, tag = 'scoped memory for tpu_custom_call.1']
    #allocation5 [shape = 'u8[1024]{0}', space=vmem, size = 0x400, scoped, tag = 'input window, operand 1']
    #allocation6 [shape = 's32[2]{0}', space=sflag, size = 0x8, scoped, tag = 'scoped memory for tpu_custom_call.1']
    #allocation7 [shape = 'u8[8192]{0}', space=vmem, size = 0x2000, scoped, tag = 'output window, operand 0']
    %8 = vsyncpa [#allocation3], 0
    %s9 = scalar_lea.sflag [#allocation3], 1
    %10 = vsyncpa %s9, 0
    %11 = vsyncpa [#allocation6], 0
    %s12 = scalar_lea.sflag [#allocation6], 1
    %13 = vsyncpa %s12, 0
    %14 = vsyncpa [#allocation4], 0
    %s15 = scalar_lea.sflag [#allocation4], 1
    %16 = vsyncpa %s15, 0
    loop: start=0, step=1, limit=4
    $region2: #{tpu_custom_call.1} parent=1 // loop_pre_header
      _
    $region3: #{tpu_custom_call.1} parent=1 // loop_header
      %s18 = sphi 0, %s22
      %p19 = scmp.ge.s32.totalorder %s18, 4
      %s25 = sphi 0, %s37
      %s26 = sphi 0, %s33
      %s27 = sphi 0, %s25
      %s28 = sphi 0, %s26
      %s29 = sphi 0, %s27
      %s30 = sphi 0, %s28
      %s42 = sphi 0, %s44
      %s45 = sphi 0, %s42
      %s46 = sphi 0, %s45
      %s62 = sphi 0, %s46
      %s68 = sphi 0, %s70
      %s71 = sphi 0, %s68
      %s72 = sphi 0, %s71
      %s88 = sphi 0, %s72
      %s94 = sphi 0, %s96
      %s97 = sphi 0, %s94
      %s98 = sphi 0, %s97
      %s114 = sphi 0, %s98
      %s122 = sphi 0, %s124
      %s125 = sphi 0, %s122
      %s126 = sphi 0, %s125
      %s142 = sphi 0, %s126
    $region4: #{tpu_custom_call.1} parent=1 // loop_header_branch
      %21 = sbr.rel (%p19) target = $region8
    $region5: #{tpu_custom_call.1} parent=1 // loop_body
      %s23 = ssub.s32 %s18, 1
      %s24 = ssub.s32 %s18, 2
      %s31 = sadd.s32 1, %s26
      %p32 = scmp.ge.s32.totalorder %s31, 1
      %s33 = scalar_select %p32, 0, %s31
      %s34 = sadd.s32 1, %s25
      %s35 = scalar_select %p32, %s34, %s25
      %p36 = scmp.ge.s32.totalorder %s35, 2
      %s37 = scalar_select %p36, 0, %s35
      %s38 = ssub.s32 %s25, %s37
      %s39 = ssub.s32 %s26, %s33
      %s40 = sor.u32 %s38, %s39
      %p41 = scmp.eq.s32.totalorder %s40, 0
      %s43 = sadd.s32 %s42, 1
      %s44 = scalar_select %p41, %s42, %s43
      %p47 = pneg %p41
      %p48 = scmp.eq.s32.totalorder %s18, 1
      %p49 = por %p47, %p48
      %p50 = scmp.ne.s32.totalorder %s42, %s45
      %p51 = scmp.eq.s32.totalorder %s18, 0
      %p52 = por %p50, %p51
      %p53 = scmp.ne.s32.totalorder %s42, %s45
      %p54 = scmp.eq.s32.totalorder %s23, 1
      %p55 = por %p53, %p54
      %p56 = scmp.ne.s32.totalorder %s45, %s46
      %p57 = scmp.eq.s32.totalorder %s23, 0
      %p58 = por %p56, %p57
      %p59 = scmp.ne.s32.totalorder %s45, %s46
      %p60 = scmp.eq.s32.totalorder %s24, 1
      %p61 = por %p59, %p60
      %p63 = scmp.ne.s32.totalorder %s46, %s62
      %p64 = scmp.eq.s32.totalorder %s24, 0
      %p65 = por %p63, %p64
      %s66 = ssub.s32 %s25, %s37
      %p67 = scmp.eq.s32.totalorder %s66, 0
      %s69 = sadd.s32 %s68, 1
      %s70 = scalar_select %p67, %s68, %s69
      %p73 = pneg %p67
      %p74 = scmp.eq.s32.totalorder %s18, 1
      %p75 = por %p73, %p74
      %p76 = scmp.ne.s32.totalorder %s68, %s71
      %p77 = scmp.eq.s32.totalorder %s18, 0
      %p78 = por %p76, %p77
      %p79 = scmp.ne.s32.totalorder %s68, %s71
      %p80 = scmp.eq.s32.totalorder %s23, 1
      %p81 = por %p79, %p80
      %p82 = scmp.ne.s32.totalorder %s71, %s72
      %p83 = scmp.eq.s32.totalorder %s23, 0
      %p84 = por %p82, %p83
      %p85 = scmp.ne.s32.totalorder %s71, %s72
      %p86 = scmp.eq.s32.totalorder %s24, 1
      %p87 = por %p85, %p86
      %p89 = scmp.ne.s32.totalorder %s72, %s88
      %p90 = scmp.eq.s32.totalorder %s24, 0
      %p91 = por %p89, %p90
      %s92 = ssub.s32 %s25, %s37
      %p93 = scmp.eq.s32.totalorder %s92, 0
      %s95 = sadd.s32 %s94, 1
      %s96 = scalar_select %p93, %s94, %s95
      %p99 = pneg %p93
      %p100 = scmp.eq.s32.totalorder %s18, 1
      %p101 = por %p99, %p100
      %p102 = scmp.ne.s32.totalorder %s94, %s97
      %p103 = scmp.eq.s32.totalorder %s18, 0
      %p104 = por %p102, %p103
      %p105 = scmp.ne.s32.totalorder %s94, %s97
      %p106 = scmp.eq.s32.totalorder %s23, 1
      %p107 = por %p105, %p106
      %p108 = scmp.ne.s32.totalorder %s97, %s98
      %p109 = scmp.eq.s32.totalorder %s23, 0
      %p110 = por %p108, %p109
      %p111 = scmp.ne.s32.totalorder %s97, %s98
      %p112 = scmp.eq.s32.totalorder %s24, 1
      %p113 = por %p111, %p112
      %p115 = scmp.ne.s32.totalorder %s98, %s114
      %p116 = scmp.eq.s32.totalorder %s24, 0
      %p117 = por %p115, %p116
      %s118 = ssub.s32 %s25, %s37
      %s119 = ssub.s32 %s26, %s33
      %s120 = sor.u32 %s118, %s119
      %p121 = scmp.eq.s32.totalorder %s120, 0
      %s123 = sadd.s32 %s122, 1
      %s124 = scalar_select %p121, %s122, %s123
      %p127 = pneg %p121
      %p128 = scmp.eq.s32.totalorder %s18, 1
      %p129 = por %p127, %p128
      %p130 = scmp.ne.s32.totalorder %s122, %s125
      %p131 = scmp.eq.s32.totalorder %s18, 0
      %p132 = por %p130, %p131
      %p133 = scmp.ne.s32.totalorder %s122, %s125
      %p134 = scmp.eq.s32.totalorder %s23, 1
      %p135 = por %p133, %p134
      %p136 = scmp.ne.s32.totalorder %s125, %s126
      %p137 = scmp.eq.s32.totalorder %s23, 0
      %p138 = por %p136, %p137
      %p139 = scmp.ne.s32.totalorder %s125, %s126
      %p140 = scmp.eq.s32.totalorder %s24, 1
      %p141 = por %p139, %p140
      %p143 = scmp.ne.s32.totalorder %s126, %s142
      %p144 = scmp.eq.s32.totalorder %s24, 0
      %p145 = por %p143, %p144
      %p146 = scmp.le.s32.totalorder 1, %s18
      %p147 = scmp.lt.s32.totalorder %s18, 3
      %p148 = pnand %p146, %p147
      %p149 = pneg %p148
      // Predicated region
      $region9: #{tpu_custom_call.1} parent=5 // pred_check
        _
      $region10: #{tpu_custom_call.1} parent=5 // pred_check_branch
        %151 = sbr.rel (%p148) target = $region12
      $region11: #{tpu_custom_call.1} parent=5 // pred_region
        %s152 = ssub.s32 %s18, 1
      $region12: #{tpu_custom_call.1} parent=5 // pred_fallthru
        _
      %p153 = scmp.lt.s32.totalorder %s18, 2
      // Predicated region
      $region13: #{tpu_custom_call.1} parent=5 // pred_check
        %p154 = pneg %p153
      $region14: #{tpu_custom_call.1} parent=5 // pred_check_branch
        %156 = sbr.rel (%p154) target = $region16
      $region15: #{tpu_custom_call.1} parent=5 // pred_region
        // Predicated region
        $region17: #{tpu_custom_call.1} parent=15 // pred_check
          %p157 = pneg %p52
        $region18: #{tpu_custom_call.1} parent=15 // pred_check_branch
          %159 = sbr.rel (%p157) target = $region20
        $region19: #{tpu_custom_call.1} parent=15 // pred_region
          %s160 = sand.u32 %s42, 1
          %s161 = scalar_lea.sflag [#allocation3], %s160
          %s162 = sand.u32 %s42, 1
          %s163 = smul.addr %s162, 8
          %s164 = scalar_lea.vmem [#allocation2], %s163
          %s166 = ssub.s32 128, 128
          %167 = vsyncadd %s161, %s166
          %s168 = sadd.s32 %s26, %s25
          %s169 = smul.addr %s168, 128
          %s170 = scalar_lea.hbm %s0, %s169
          %s172 = sshll.u32 %s164, 4
          %s173 = int_to_ptr.vmem [resolvable:$true] %s172
          %175 = dma.hbm_to_vmem [thread:$0]  %s170, 128, %s173, %s161
        $region20: #{tpu_custom_call.1} parent=15 // pred_fallthru
          _
        // Predicated region
        $region21: #{tpu_custom_call.1} parent=15 // pred_check
          %p176 = pneg %p78
        $region22: #{tpu_custom_call.1} parent=15 // pred_check_branch
          %178 = sbr.rel (%p176) target = $region24
        $region23: #{tpu_custom_call.1} parent=15 // pred_region
          %s179 = sand.u32 %s68, 1
          %s180 = scalar_lea.sflag [#allocation6], %s179
          %s181 = sand.u32 %s68, 1
          %s182 = scalar_lea.vmem [#allocation5], %s181
          %s184 = ssub.s32 16, 16
          %185 = vsyncadd %s180, %s184
          %s186 = smul.addr %s25, 16
          %s187 = scalar_lea.hbm %s1, %s186
          %s189 = sshll.u32 %s182, 4
          %s190 = int_to_ptr.vmem [resolvable:$true] %s189
          %192 = dma.hbm_to_vmem [thread:$0]  %s187, 16, %s190, %s180
        $region24: #{tpu_custom_call.1} parent=15 // pred_fallthru
          _
        // Predicated region
        $region25: #{tpu_custom_call.1} parent=15 // pred_check
          %p193 = pneg %p104
        $region26: #{tpu_custom_call.1} parent=15 // pred_check_branch
          %195 = sbr.rel (%p193) target = $region28
        $region27: #{tpu_custom_call.1} parent=15 // pred_region
          %p196 = scmp.lt.s32.totalorder %s25, 1
          %s197 = scalar_select %p196, %s25, 1
          %s198 = scalar_lea.vmem %s2, %s197
        $region28: #{tpu_custom_call.1} parent=15 // pred_fallthru
          _
      $region16: #{tpu_custom_call.1} parent=5 // pred_fallthru
        _
      %p199 = scmp.le.s32.totalorder 1, %s18
      %p200 = scmp.lt.s32.totalorder %s18, 3
      %p201 = pnand %p199, %p200
      %p202 = pneg %p201
      // Predicated region
      $region29: #{tpu_custom_call.1} parent=5 // pred_check
        _
      $region30: #{tpu_custom_call.1} parent=5 // pred_check_branch
        %204 = sbr.rel (%p201) target = $region32
      $region31: #{tpu_custom_call.1} parent=5 // pred_region
        %s205 = ssub.s32 %s18, 1
        %s206 = sand.u32 %s45, 1
        %s207 = scalar_lea.sflag [#allocation3], %s206
        %s208 = sand.u32 %s45, 1
        %s209 = smul.addr %s208, 8
        %s210 = scalar_lea.vmem [#allocation2], %s209
        // Predicated region
        $region33: #{tpu_custom_call.1} parent=31 // pred_check
          %p211 = pneg %p58
        $region34: #{tpu_custom_call.1} parent=31 // pred_check_branch
          %213 = sbr.rel (%p211) target = $region36
        $region35: #{tpu_custom_call.1} parent=31 // pred_region
          %214 = dma.done %s207, 128
        $region36: #{tpu_custom_call.1} parent=31 // pred_fallthru
          _
        %s215 = sand.u32 %s71, 1
        %s216 = scalar_lea.sflag [#allocation6], %s215
        %s217 = sand.u32 %s71, 1
        %s218 = scalar_lea.vmem [#allocation5], %s217
        // Predicated region
        $region37: #{tpu_custom_call.1} parent=31 // pred_check
          %p219 = pneg %p84
        $region38: #{tpu_custom_call.1} parent=31 // pred_check_branch
          %221 = sbr.rel (%p219) target = $region40
        $region39: #{tpu_custom_call.1} parent=31 // pred_region
          %222 = dma.done %s216, 16
        $region40: #{tpu_custom_call.1} parent=31 // pred_fallthru
          _
        %s223 = sand.u32 %s45, 1
        %s224 = scalar_lea.sflag [#allocation3], %s223
        %s225 = sand.u32 %s45, 1
        %s226 = smul.addr %s225, 8
        %s227 = scalar_lea.vmem [#allocation2], %s226
        %p228 = pneg %p58
        %p229 = pneg %p55
        %s230 = sand.u32 %s71, 1
        %s231 = scalar_lea.sflag [#allocation6], %s230
        %s232 = sand.u32 %s71, 1
        %s233 = scalar_lea.vmem [#allocation5], %s232
        %p234 = pneg %p84
        %p235 = pneg %p81
        %p236 = scmp.lt.s32.totalorder %s27, 1
        %s237 = scalar_select %p236, %s27, 1
        %s238 = scalar_lea.vmem %s2, %s237
        %p239 = pneg %p110
        %p240 = pneg %p107
        %p241 = pneg %p138
        %p242 = pneg %p135
        %s243 = sand.u32 %s125, 1
        %s244 = scalar_lea.sflag [#allocation4], %s243
        %s245 = sand.u32 %s125, 1
        %s246 = smul.addr %s245, 8
        %s247 = scalar_lea.vmem [#allocation7], %s246
        %p248 = scmp.lt.s32.totalorder %s27, 1
        %s249 = scalar_select %p248, %s27, 1
        %s250 = scalar_lea.vmem %s2, %s249
        %v251 = vld [vmem:[%s210] sm:$0xff]
        %vm252 = vcmask 261120
        %v253 = vsel %vm252, %v251, 0.0
        %254 = vadd.xlane.f32.xlu0 %v253
        %v255 = vpop.xlane.xlu0 %254
        %v256 = vmul.f32 %v251, %v251
        %v257 = vsel %vm252, %v256, 0.0
        %258 = vadd.xlane.f32.xlu0 %v257
        %v259 = vpop.xlane.xlu0 %258
        %v260 = vmul.f32 %v255, 0.03125
        %v261 = vmul.f32 %v260, 32.0
        %v262 = vmul.f32 %v261, %v260
        %v263 = vsub.f32 %v259, %v262
        %v264 = vmax.f32 %v263, 0.0
        %v265 = vmul.f32 %v264, 0.032258064
        %v266 = vrsqrt.pop %v265
        %v267 = vmul.f32 %v265, %v266
        %vm268 = vcmp.eq.f32.partialorder %v265, inf
        %v269 = vsel %vm268, %v265, %v267
        %vm270 = vcmp.eq.f32.partialorder %v265, 0.0
        %v271 = vand.u32 %v265, 2147483648
        %v272 = vsel %vm270, %v271, %v269
        %v273 = vadd.f32 %v272, 1e-06
        %v274 = vrcp.pop %v273
        %v275 = vsub.f32 %v251, %v260
        %v276 = vmul.f32 %v275, %v274
        %v277 = vld [vmem:[%s218] sm:$0x1]
        %v279 = vlaneseq
        %v280 = vshrl.u32 %v279, 7
        %v281 = vsub.s32 0, %v280
        %v282 = vrot.slane %v277, %v281
        %v284 = vmul.f32 %v282, %v276
        %v285 = vld [vmem:[%s250] sm:$0x1]
        %v287 = vlaneseq
        %v288 = vshrl.u32 %v287, 7
        %v289 = vsub.s32 0, %v288
        %v290 = vrot.slane %v285, %v289
        %v292 = vadd.f32 %v284, %v290
        %293 = vst.msk [vmem:[%s247] sm:$0xff] %vm252, %v292
        %s294 = sand.u32 %s125, 1
        %s295 = scalar_lea.sflag [#allocation4], %s294
        %s296 = sand.u32 %s125, 1
        %s297 = smul.addr %s296, 8
        %s298 = scalar_lea.vmem [#allocation7], %s297
        // Predicated region
        $region41: #{tpu_custom_call.1} parent=31 // pred_check
          %p299 = pneg %p135
        $region42: #{tpu_custom_call.1} parent=31 // pred_check_branch
          %301 = sbr.rel (%p299) target = $region44
        $region43: #{tpu_custom_call.1} parent=31 // pred_region
          %s303 = ssub.s32 128, 128
          %304 = vsyncadd %s295, %s303
          %s305 = sadd.s32 %s28, %s27
          %s306 = smul.addr %s305, 128
          %s307 = scalar_lea.hbm %s3, %s306
          %s309 = sshll.u32 %s298, 4
          %s310 = int_to_ptr.vmem [resolvable:$true] %s309
          %312 = dma.vmem_to_hbm [thread:$0]  %s310, 128, %s307, %s295
        $region44: #{tpu_custom_call.1} parent=31 // pred_fallthru
          _
      $region32: #{tpu_custom_call.1} parent=5 // pred_fallthru
        _
      %p313 = scmp.le.s32.totalorder 2, %s18
      // Predicated region
      $region45: #{tpu_custom_call.1} parent=5 // pred_check
        %p314 = pneg %p313
      $region46: #{tpu_custom_call.1} parent=5 // pred_check_branch
        %316 = sbr.rel (%p314) target = $region48
      $region47: #{tpu_custom_call.1} parent=5 // pred_region
        %s317 = ssub.s32 %s18, 2
        // Predicated region
        $region49: #{tpu_custom_call.1} parent=47 // pred_check
          %p318 = pneg %p141
        $region50: #{tpu_custom_call.1} parent=47 // pred_check_branch
          %320 = sbr.rel (%p318) target = $region52
        $region51: #{tpu_custom_call.1} parent=47 // pred_region
          %s321 = sand.u32 %s126, 1
          %s322 = scalar_lea.sflag [#allocation4], %s321
          %s323 = sand.u32 %s126, 1
          %s324 = smul.addr %s323, 8
          %s325 = scalar_lea.vmem [#allocation7], %s324
          %326 = dma.done %s322, 128
        $region52: #{tpu_custom_call.1} parent=47 // pred_fallthru
          _
      $region48: #{tpu_custom_call.1} parent=5 // pred_fallthru
        _
    $region6: #{tpu_custom_call.1} parent=1 // loop_footer
      %s22 = sadd.s32 1, %s18
    $region7: #{tpu_custom_call.1} parent=1 // loop_footer_branch
      %17 = sbr.rel target = $region3
    $region8: #{tpu_custom_call.1} parent=1 // loop_exit
      _
    %327 = vsyncpa [#allocation3], 1
    %s328 = scalar_lea.sflag [#allocation3], 1
    %329 = vsyncpa %s328, 1
    %330 = vsyncpa [#allocation6], 1
    %s331 = scalar_lea.sflag [#allocation6], 1
    %332 = vsyncpa %s331, 1
    %333 = vsyncpa [#allocation4], 1
    %s334 = scalar_lea.sflag [#allocation4], 1
    %335 = vsyncpa %s334, 1

</llo_original>
